<compile_context>
chip_gen: v7x
topology: tpu7x:2x2x1
jax: 0.10.0
libtpu: 0.0.40
codegen_flags: <defaults>
</compile_context>

<pallas_src>
import functools

import jax
import jax.numpy as jnp
from jax.experimental import pallas as pl
from jax.experimental.pallas import tpu as pltpu


def _round_up(x, m):
    return (x + m - 1) // m * m


# Per-generation VMEM capacity (queried once at import; conservative fallback).
try:
    _VMEM_CAP = int(pltpu.get_tpu_info().vmem_capacity_bytes)
except Exception:  # pragma: no cover - e.g. emulated backend
    _VMEM_CAP = 64 * 1024 * 1024
# v5e/v6e (128 MiB) -> 96 MiB limit; v7x (64 MiB) -> 48 MiB limit.
_VMEM_LIMIT = min(_VMEM_CAP * 3 // 4, 96 * 1024 * 1024)
_TILE_BUDGET = _VMEM_LIMIT // 2


def _cnn_layer_kernel(p_ref, w_ref, b_ref, o_ref, *, p_true, b_tile):
    """One grid step: `b_tile` batch elements.

    p_ref: (B_tile, CKp, Pp) bf16  im2col patches (spatial on the lane axis)
    w_ref: (Cs, CKp)         bf16  conv weight (C_out padded to mult of 8)
    b_ref: (Cs, 1)           f32   bias
    o_ref: (B_tile, Cs, Pp)  f32   Mish + InstanceNorm output (channel-major)
    """
    Cs, _ = w_ref.shape
    Pp = o_ref.shape[-1]
    inv_p = 1.0 / float(p_true)

    # Hoisted operands / spatial-validity mask (padded lanes excluded from stats).
    w = w_ref[...]
    bias = b_ref[...]
    valid = jax.lax.broadcasted_iota(jnp.int32, (Cs, Pp), 1) < p_true

    for b in range(b_tile):  # small static loop; temporaries are one vreg each
        # Conv: (Cs, CKp) x (CKp, Pp) -> (Cs, Pp), bf16 in / f32 accumulate.
        x = jnp.dot(w, p_ref[b], preferred_element_type=jnp.float32) + bias

        # Mish with a single exp:  tanh(softplus(x)) = t / (t + 2),
        # t = e^x (e^x + 2);  PyTorch softplus threshold 20 -> y = x for x > 20.
        e = jnp.exp(jnp.minimum(x, 20.0))
        t = e * (e + 2.0)
        y = jnp.where(x > 20.0, x, x * t * pl.reciprocal(t + 2.0, approx=True))

        # InstanceNorm2d (affine=False, eps=1e-5), two-pass over TRUE spatial
        # positions only (lane reduction -> XLU).
        ym = jnp.where(valid, y, 0.0)
        mean = jnp.sum(ym, axis=-1, keepdims=True) * inv_p
        d = jnp.where(valid, y - mean, 0.0)
        var = jnp.sum(d * d, axis=-1, keepdims=True) * inv_p
        o_ref[b] = d * jax.lax.rsqrt(var + 1e-5)


def _extract_patches(x, K, S):
    """im2col via strided slices (no gathers): NCHW -> [N, C*K*K, Ho*Wo].

    CK flatten order is (C, kh, kw), matching Conv2d weight.reshape(C_out, -1);
    spatial stays trailing so no large transpose is materialized.
    """
    N, C, H, W = x.shape
    Ho = (H - K) // S + 1
    Wo = (W - K) // S + 1
    cols = []
    for kh in range(K):
        for kw in range(K):
            cols.append(jax.lax.slice(
                x, (0, 0, kh, kw),
                (N, C, kh + S * (Ho - 1) + 1, kw + S * (Wo - 1) + 1),
                (1, 1, S, S)))                     # [N, C, Ho, Wo]
    p = jnp.stack(cols, axis=2)                    # [N, C, K*K, Ho, Wo]
    return p.reshape(N, C * K * K, Ho * Wo), Ho, Wo


@functools.partial(jax.jit, static_argnames=("kernel", "stride"))
def cnn_layer_forward(x, weight, bias, kernel=4, stride=2):
    """Conv2d(k, s, p=0) -> Mish -> InstanceNorm2d.  x: NCHW float32."""
    N, C_in, H, W = x.shape
    C_out = weight.shape[0]
    K, S = kernel, stride

    # bf16 BEFORE im2col -> half the bytes of the materialized patch copy.
    patches, Ho, Wo = _extract_patches(x.astype(jnp.bfloat16), K, S)
    P = Ho * Wo
    CK = C_in * K * K

    Pp = _round_up(P, 128)    # lane (spatial) axis
    CKp = _round_up(CK, 8)    # contraction dim: sublane-aligned only, no 128 pad
    Cs = _round_up(C_out, 8)  # sublane (channel) axis of the output

    # VMEM per batch element: 2x-buffered bf16 patches + 2x-buffered f32 output
    # + ~6 f32 elementwise temporaries (x, e, t, y, ym, d).
    per_b = 2 * (CKp * Pp * 2) + 2 * (Cs * Pp * 4) + 6 * (Cs * Pp * 4)
    resident = Cs * CKp * 2 + Cs * 4
    B_tile = max(1, min(N, 32, (_TILE_BUDGET - resident) // max(per_b, 1)))
    if N >= 2:
        B_tile = min(B_tile, max(1, N // 2))  # >= 2 grid steps -> both TCs busy
    B_tile = int(B_tile)
    Np = _round_up(N, B_tile)

    # Zero-padded, aligned operands.
    patches_p = jnp.pad(patches, ((0, Np - N), (0, CKp - CK), (0, Pp - P)))
    w2d = jnp.pad(weight.reshape(C_out, CK).astype(jnp.bfloat16),
                  ((0, Cs - C_out), (0, CKp - CK)))
    b2d = jnp.pad(bias.reshape(C_out, 1).astype(jnp.float32),
                  ((0, Cs - C_out), (0, 0)))

    out = pl.pallas_call(
        functools.partial(_cnn_layer_kernel, p_true=P, b_tile=B_tile),
        out_shape=jax.ShapeDtypeStruct((Np, Cs, Pp), jnp.float32),
        grid_spec=pltpu.PrefetchScalarGridSpec(
            num_scalar_prefetch=0,
            grid=(Np // B_tile,),
            in_specs=[
                pl.BlockSpec((B_tile, CKp, Pp), lambda i: (i, 0, 0)),
                pl.BlockSpec((Cs, CKp), lambda i: (0, 0)),
                pl.BlockSpec((Cs, 1), lambda i: (0, 0)),
            ],
            out_specs=pl.BlockSpec((B_tile, Cs, Pp), lambda i: (i, 0, 0)),
        ),
        compiler_params=pltpu.CompilerParams(
            dimension_semantics=("parallel",),
            vmem_limit_bytes=int(_VMEM_LIMIT)),
    )(patches_p, w2d, b2d)

    # Already channel-major (NCHW): just strip padding and unfold spatial dims.
    return out[:N, :C_out, :P].reshape(N, C_out, Ho, Wo)


def _reference(x, weight, bias, K, S):
    """Pure-JAX f32 reference of the module forward (for a tolerance check)."""
    y = jax.lax.conv_general_dilated(
        x, weight, window_strides=(S, S), padding="VALID",
        dimension_numbers=("NCHW", "OIHW", "NCHW"))
    y = y + bias.reshape(1, -1, 1, 1)
    y = y * jnp.tanh(jnp.logaddexp(y, 0.0))                  # Mish
    mean = jnp.mean(y, axis=(2, 3), keepdims=True)
    var = jnp.mean((y - mean) ** 2, axis=(2, 3), keepdims=True)
    return (y - mean) * jax.lax.rsqrt(var + 1e-5)            # InstanceNorm2d


if __name__ == "__main__":
    # Small deterministic example consistent with the module:
    # in_channels=4, out_channels=8, kernel=4, stride=2, padding=0, dropout=0,
    # use_norm=True, inst_norm=True.
    key = jax.random.PRNGKey(0)
    kx, kw, kb = jax.random.split(key, 3)

    N, C_in, H, W = 2, 4, 16, 16
    C_out, K, S = 8, 4, 2

    x = jax.random.normal(kx, (N, C_in, H, W), dtype=jnp.float32)
    fan_in = C_in * K * K
    bound = 1.0 / (fan_in ** 0.5)
    weight = jax.random.uniform(kw, (C_out, C_in, K, K), jnp.float32, -bound, bound)
    bias = jax.random.uniform(kb, (C_out,), jnp.float32, -bound, bound)

    # TODO(synk): Dropout2d not implemented (default dropout=0 -> layer absent);
    # BatchNorm2d branch (inst_norm=False) not implemented (default is True).
    y = cnn_layer_forward(x, weight, bias, kernel=K, stride=S)
    jax.block_until_ready(y)
    assert y.shape == (N, C_out, (H - K) // S + 1, (W - K) // S + 1)

    # Loose tolerance: bf16 matmul operands + approx EUP reciprocal vs f32 ref.
    y_ref = _reference(x, weight, bias, K, S)
    err = float(jnp.max(jnp.abs(y - y_ref)))
    assert err < 1e-1, f"max abs error vs reference too large: {err}"
    print("KERNEL_OK")
</pallas_src>

<mosaic_0001>
module attributes {stable_mosaic.version = 11 : i64} {
  func.func @_cnn_layer_kernel(%arg0: i32, %arg1: memref<1x64x128xbf16, #tpu.memory_space<vmem>>, %arg2: memref<8x64xbf16, #tpu.memory_space<vmem>>, %arg3: memref<8x1xf32, #tpu.memory_space<vmem>>, %arg4: memref<1x8x128xf32, #tpu.memory_space<vmem>>) attributes {dimension_semantics = [#tpu.dimension_semantics<parallel>], iteration_bounds = array<i64: 2>, scalar_prefetch = 0 : i64, scratch_operands = 0 : i64, tpu.core_type = #tpu.core_type<tc>, window_params = [{transform_indices = @transform_0, window_bounds = array<i64: 1, 64, 128>}, {pipeline_mode = #tpu.pipeline_mode<synchronous>, transform_indices = @transform_1, window_bounds = array<i64: 8, 64>}, {pipeline_mode = #tpu.pipeline_mode<synchronous>, transform_indices = @transform_2, window_bounds = array<i64: 8, 1>}, {transform_indices = @transform_3, window_bounds = array<i64: 1, 8, 128>}]} {
    %c0 = arith.constant 0 : index
    %c0_0 = arith.constant 0 : index
    %0 = vector.load %arg2[%c0, %c0_0] : memref<8x64xbf16, #tpu.memory_space<vmem>>, vector<8x64xbf16>
    %c0_1 = arith.constant 0 : index
    %c0_2 = arith.constant 0 : index
    %1 = vector.load %arg3[%c0_1, %c0_2] : memref<8x1xf32, #tpu.memory_space<vmem>>, vector<8x1xf32>
    %2 = tpu.iota {dimensions = array<i32: 1>} : vector<8x128xi32>
    %c49_i32 = arith.constant 49 : i32
    %3 = vector.broadcast %c49_i32 : i32 to vector<8x128xi32>
    %4 = arith.cmpi slt, %2, %3 : vector<8x128xi32>
    %c0_3 = arith.constant 0 : index
    %c0_4 = arith.constant 0 : index
    %c0_5 = arith.constant 0 : index
    %5 = vector.load %arg1[%c0_3, %c0_4, %c0_5] : memref<1x64x128xbf16, #tpu.memory_space<vmem>>, vector<1x64x128xbf16>
    %6 = vector.shape_cast %5 : vector<1x64x128xbf16> to vector<64x128xbf16>
    %cst = arith.constant dense<0.000000e+00> : vector<8x128xf32>
    %7 = tpu.matmul %0, %6, %cst {dimension_numbers = #tpu.dot_dimension_numbers<[1], [0], [0], [1], [0, 0, 1, 1], [], []>} : vector<8x64xbf16>, vector<64x128xbf16>, vector<8x128xf32> -> vector<8x128xf32>
    %8 = vector.broadcast %1 : vector<8x1xf32> to vector<8x128xf32>
    %9 = arith.addf %7, %8 : vector<8x128xf32>
    %cst_6 = arith.constant 2.000000e+01 : f32
    %10 = vector.broadcast %cst_6 : f32 to vector<8x128xf32>
    %11 = arith.minimumf %9, %10 : vector<8x128xf32>
    %12 = math.exp %11 : vector<8x128xf32>
    %cst_7 = arith.constant 2.000000e+00 : f32
    %13 = vector.broadcast %cst_7 : f32 to vector<8x128xf32>
    %14 = arith.addf %12, %13 : vector<8x128xf32>
    %15 = arith.mulf %12, %14 : vector<8x128xf32>
    %cst_8 = arith.constant 2.000000e+01 : f32
    %16 = vector.broadcast %cst_8 : f32 to vector<8x128xf32>
    %17 = arith.cmpf ogt, %9, %16 : vector<8x128xf32>
    %18 = arith.mulf %9, %15 : vector<8x128xf32>
    %cst_9 = arith.constant 2.000000e+00 : f32
    %19 = vector.broadcast %cst_9 : f32 to vector<8x128xf32>
    %20 = arith.addf %15, %19 : vector<8x128xf32>
    %21 = tpu.reciprocal %20 {approx = true} : vector<8x128xf32> -> vector<8x128xf32>
    %22 = arith.mulf %18, %21 : vector<8x128xf32>
    %23 = arith.select %17, %9, %22 : vector<8x128xi1>, vector<8x128xf32>
    %cst_10 = arith.constant 0.000000e+00 : f32
    %24 = vector.broadcast %cst_10 : f32 to vector<8x128xf32>
    %25 = arith.select %4, %23, %24 : vector<8x128xi1>, vector<8x128xf32>
    %cst_11 = arith.constant dense<0.000000e+00> : vector<8xf32>
    %26 = vector.multi_reduction <add>, %25, %cst_11 [1] : vector<8x128xf32> to vector<8xf32>
    %27 = vector.shape_cast %26 : vector<8xf32> to vector<8x1xf32>
    %cst_12 = arith.constant 0.0204081628 : f32
    %28 = vector.broadcast %cst_12 : f32 to vector<8x1xf32>
    %29 = arith.mulf %27, %28 : vector<8x1xf32>
    %30 = vector.broadcast %29 : vector<8x1xf32> to vector<8x128xf32>
    %31 = arith.subf %23, %30 : vector<8x128xf32>
    %cst_13 = arith.constant 0.000000e+00 : f32
    %32 = vector.broadcast %cst_13 : f32 to vector<8x128xf32>
    %33 = arith.select %4, %31, %32 : vector<8x128xi1>, vector<8x128xf32>
    %34 = arith.mulf %33, %33 : vector<8x128xf32>
    %cst_14 = arith.constant dense<0.000000e+00> : vector<8xf32>
    %35 = vector.multi_reduction <add>, %34, %cst_14 [1] : vector<8x128xf32> to vector<8xf32>
    %36 = vector.shape_cast %35 : vector<8xf32> to vector<8x1xf32>
    %cst_15 = arith.constant 0.0204081628 : f32
    %37 = vector.broadcast %cst_15 : f32 to vector<8x1xf32>
    %38 = arith.mulf %36, %37 : vector<8x1xf32>
    %cst_16 = arith.constant 9.99999974E-6 : f32
    %39 = vector.broadcast %cst_16 : f32 to vector<8x1xf32>
    %40 = arith.addf %38, %39 : vector<8x1xf32>
    %41 = math.rsqrt %40 : vector<8x1xf32>
    %42 = vector.broadcast %41 : vector<8x1xf32> to vector<8x128xf32>
    %43 = arith.mulf %33, %42 : vector<8x128xf32>
    %c0_17 = arith.constant 0 : index
    %c0_18 = arith.constant 0 : index
    %c0_19 = arith.constant 0 : index
    %44 = vector.load %arg4[%c0_17, %c0_18, %c0_19] : memref<1x8x128xf32, #tpu.memory_space<vmem>>, vector<1x8x128xf32>
    %45 = vector.shape_cast %44 : vector<1x8x128xf32> to vector<8x128xf32>
    %46 = vector.shape_cast %43 : vector<8x128xf32> to vector<1x8x128xf32>
    tpu.vector_store %arg4[%c0_17, %c0_18, %c0_19], %46 {strides = array<i32>} : memref<1x8x128xf32, #tpu.memory_space<vmem>>, vector<1x8x128xf32>,
    return
  }
  func.func @transform_0(%arg0: i32) -> (i32, i32, i32) {
    %c0_i32 = arith.constant 0 : i32
    %c0_i32_0 = arith.constant 0 : i32
    %c0_i32_1 = arith.constant 0 : i32
    return %arg0, %c0_i32, %c0_i32_0 : i32, i32, i32
  }
  func.func @transform_1(%arg0: i32) -> (i32, i32) {
    %c0_i32 = arith.constant 0 : i32
    %c0_i32_0 = arith.constant 0 : i32
    %c0_i32_1 = arith.constant 0 : i32
    return %c0_i32, %c0_i32_0 : i32, i32
  }
  func.func @transform_2(%arg0: i32) -> (i32, i32) {
    %c0_i32 = arith.constant 0 : i32
    %c0_i32_0 = arith.constant 0 : i32
    %c0_i32_1 = arith.constant 0 : i32
    return %c0_i32, %c0_i32_0 : i32, i32
  }
  func.func @transform_3(%arg0: i32) -> (i32, i32, i32) {
    %c0_i32 = arith.constant 0 : i32
    %c0_i32_0 = arith.constant 0 : i32
    %c0_i32_1 = arith.constant 0 : i32
    return %arg0, %c0_i32, %c0_i32_0 : i32, i32, i32
  }
}

</mosaic_0001>

<llo_original>
// kernel: cnn_layer_forward.1
$region0: #{cnn_layer_forward.1}
  #allocation0 [shape = 'u32[]', space=smem, size = 0x4, offset = 0x4, fixed_abs, tag = 'smem constant byte address 0x4 - core index']
  #allocation1 [shape = 'u32[144,128]{1,0:T(1,128)}', space=vmem, size = 0x12000, scoped, tag = 'internal scratch']
  %s0 = inlined_call_operand.vmem [shape: bf16[2,64,128], index: 0, kind: input, shape index: {}]
  %s1 = inlined_call_operand.vmem [shape: bf16[8,64], index: 1, kind: input, shape index: {}]
  %s2 = inlined_call_operand.vmem [shape: f32[8,1], index: 2, kind: input, shape index: {}]
  %s3 = inlined_call_operand.vmem [shape: f32[2,8,128], index: 3, kind: output, shape index: {}]
  %s4 = sld [smem:[#allocation0]]
  $region45: #{cnn_layer_forward.1} parent=0
    _
  %s6 = ssub.s32 1, %s4
  %s7 = scalar_select 0, %s6, %s4
  loop: start=0, step=1, limit=4
  $region2: #{cnn_layer_forward.1} parent=0 // loop_pre_header
    _
  $region3: #{cnn_layer_forward.1} parent=0 // loop_header
    %s9 = sphi 0, %s13
    %p10 = scmp.ge.s32.totalorder %s9, 4
    %s19 = sphi 0, %s21
    %s22 = sphi 0, %s19
    %s23 = sphi 0, %s22
    %s39 = sphi 0, %s23
    %s43 = sphi 0, %s43
    %s45 = sphi 0, %s43
    %s46 = sphi 0, %s45
    %s60 = sphi 0, %s46
    %s64 = sphi 0, %s64
    %s66 = sphi 0, %s64
    %s67 = sphi 0, %s66
    %s81 = sphi 0, %s67
    %s87 = sphi 0, %s89
    %s90 = sphi 0, %s87
    %s91 = sphi 0, %s90
    %s107 = sphi 0, %s91
  $region4: #{cnn_layer_forward.1} parent=0 // loop_header_branch
    %12 = sbr.rel (%p10) target = $region8
  $region5: #{cnn_layer_forward.1} parent=0 // loop_body
    %s14 = ssub.s32 %s9, 1
    %s15 = ssub.s32 %s9, 2
    %s16 = sadd.s32 %s9, 1
    %s17 = ssub.s32 %s9, %s16
    %p18 = scmp.eq.s32.totalorder %s17, 0
    %s20 = sadd.s32 %s19, 1
    %s21 = scalar_select %p18, %s19, %s20
    %p24 = pneg %p18
    %p25 = scmp.eq.s32.totalorder %s9, 1
    %p26 = por %p24, %p25
    %p27 = scmp.ne.s32.totalorder %s19, %s22
    %p28 = scmp.eq.s32.totalorder %s9, 0
    %p29 = por %p27, %p28
    %p30 = scmp.ne.s32.totalorder %s19, %s22
    %p31 = scmp.eq.s32.totalorder %s14, 1
    %p32 = por %p30, %p31
    %p33 = scmp.ne.s32.totalorder %s22, %s23
    %p34 = scmp.eq.s32.totalorder %s14, 0
    %p35 = por %p33, %p34
    %p36 = scmp.ne.s32.totalorder %s22, %s23
    %p37 = scmp.eq.s32.totalorder %s15, 1
    %p38 = por %p36, %p37
    %p40 = scmp.ne.s32.totalorder %s23, %s39
    %p41 = scmp.eq.s32.totalorder %s15, 0
    %p42 = por %p40, %p41
    %s44 = sadd.s32 %s43, 1
    %p47 = scmp.eq.s32.totalorder %s9, 1
    %p48 = scmp.ne.s32.totalorder %s43, %s45
    %p49 = scmp.eq.s32.totalorder %s9, 0
    %p50 = por %p48, %p49
    %p51 = scmp.ne.s32.totalorder %s43, %s45
    %p52 = scmp.eq.s32.totalorder %s14, 1
    %p53 = por %p51, %p52
    %p54 = scmp.ne.s32.totalorder %s45, %s46
    %p55 = scmp.eq.s32.totalorder %s14, 0
    %p56 = por %p54, %p55
    %p57 = scmp.ne.s32.totalorder %s45, %s46
    %p58 = scmp.eq.s32.totalorder %s15, 1
    %p59 = por %p57, %p58
    %p61 = scmp.ne.s32.totalorder %s46, %s60
    %p62 = scmp.eq.s32.totalorder %s15, 0
    %p63 = por %p61, %p62
    %s65 = sadd.s32 %s64, 1
    %p68 = scmp.eq.s32.totalorder %s9, 1
    %p69 = scmp.ne.s32.totalorder %s64, %s66
    %p70 = scmp.eq.s32.totalorder %s9, 0
    %p71 = por %p69, %p70
    %p72 = scmp.ne.s32.totalorder %s64, %s66
    %p73 = scmp.eq.s32.totalorder %s14, 1
    %p74 = por %p72, %p73
    %p75 = scmp.ne.s32.totalorder %s66, %s67
    %p76 = scmp.eq.s32.totalorder %s14, 0
    %p77 = por %p75, %p76
    %p78 = scmp.ne.s32.totalorder %s66, %s67
    %p79 = scmp.eq.s32.totalorder %s15, 1
    %p80 = por %p78, %p79
    %p82 = scmp.ne.s32.totalorder %s67, %s81
    %p83 = scmp.eq.s32.totalorder %s15, 0
    %p84 = por %p82, %p83
    %s85 = ssub.s32 %s9, %s16
    %p86 = scmp.eq.s32.totalorder %s85, 0
    %s88 = sadd.s32 %s87, 1
    %s89 = scalar_select %p86, %s87, %s88
    %p92 = pneg %p86
    %p93 = scmp.eq.s32.totalorder %s9, 1
    %p94 = por %p92, %p93
    %p95 = scmp.ne.s32.totalorder %s87, %s90
    %p96 = scmp.eq.s32.totalorder %s9, 0
    %p97 = por %p95, %p96
    %p98 = scmp.ne.s32.totalorder %s87, %s90
    %p99 = scmp.eq.s32.totalorder %s14, 1
    %p100 = por %p98, %p99
    %p101 = scmp.ne.s32.totalorder %s90, %s91
    %p102 = scmp.eq.s32.totalorder %s14, 0
    %p103 = por %p101, %p102
    %p104 = scmp.ne.s32.totalorder %s90, %s91
    %p105 = scmp.eq.s32.totalorder %s15, 1
    %p106 = por %p104, %p105
    %p108 = scmp.ne.s32.totalorder %s91, %s107
    %p109 = scmp.eq.s32.totalorder %s15, 0
    %p110 = por %p108, %p109
    %p111 = scmp.le.s32.totalorder 1, %s9
    %p112 = scmp.lt.s32.totalorder %s9, 3
    %p113 = pnand %p111, %p112
    %p114 = pneg %p113
    // Predicated region
    $region9: #{cnn_layer_forward.1} parent=5 // pred_check
      _
    $region10: #{cnn_layer_forward.1} parent=5 // pred_check_branch
      %116 = sbr.rel (%p113) target = $region12
    $region11: #{cnn_layer_forward.1} parent=5 // pred_region
      %s117 = ssub.s32 %s9, 1
      // Predicated region
      $region13: #{cnn_layer_forward.1} parent=11 // pred_check
        %p118 = pneg %p56
      $region14: #{cnn_layer_forward.1} parent=11 // pred_check_branch
        %120 = sbr.rel (%p118) target = $region16
      $region15: #{cnn_layer_forward.1} parent=11 // pred_region
        _
      $region16: #{cnn_layer_forward.1} parent=11 // pred_fallthru
        _
      // Predicated region
      $region17: #{cnn_layer_forward.1} parent=11 // pred_check
        %p121 = pneg %p77
      $region18: #{cnn_layer_forward.1} parent=11 // pred_check_branch
        %123 = sbr.rel (%p121) target = $region20
      $region19: #{cnn_layer_forward.1} parent=11 // pred_region
        _
      $region20: #{cnn_layer_forward.1} parent=11 // pred_fallthru
        _
    $region12: #{cnn_layer_forward.1} parent=5 // pred_fallthru
      _
    %p124 = scmp.lt.s32.totalorder %s9, 2
    // Predicated region
    $region21: #{cnn_layer_forward.1} parent=5 // pred_check
      %p125 = pneg %p124
    $region22: #{cnn_layer_forward.1} parent=5 // pred_check_branch
      %127 = sbr.rel (%p125) target = $region24
    $region23: #{cnn_layer_forward.1} parent=5 // pred_region
      // Predicated region
      $region25: #{cnn_layer_forward.1} parent=23 // pred_check
        %p128 = pneg %p29
      $region26: #{cnn_layer_forward.1} parent=23 // pred_check_branch
        %130 = sbr.rel (%p128) target = $region28
      $region27: #{cnn_layer_forward.1} parent=23 // pred_region
        %p131 = scmp.lt.s32.totalorder %s9, 1
        %s132 = scalar_select %p131, %s9, 1
        %s133 = smul.addr %s132, 8
        %s134 = smul.addr %s133, 4
        %s135 = scalar_lea.vmem %s0, %s134
      $region28: #{cnn_layer_forward.1} parent=23 // pred_fallthru
        _
    $region24: #{cnn_layer_forward.1} parent=5 // pred_fallthru
      _
    %p136 = scmp.le.s32.totalorder 1, %s9
    %p137 = scmp.lt.s32.totalorder %s9, 3
    %p138 = pnand %p136, %p137
    %p139 = pneg %p138
    // Predicated region
    $region29: #{cnn_layer_forward.1} parent=5 // pred_check
      _
    $region30: #{cnn_layer_forward.1} parent=5 // pred_check_branch
      %141 = sbr.rel (%p138) target = $region32
    $region31: #{cnn_layer_forward.1} parent=5 // pred_region
      %s142 = ssub.s32 %s9, 1
      %p143 = scmp.lt.s32.totalorder %s14, 1
      %s144 = scalar_select %p143, %s14, 1
      %s145 = smul.addr %s144, 8
      %s146 = smul.addr %s145, 4
      %s147 = scalar_lea.vmem %s0, %s146
      %p148 = pneg %p35
      %p149 = pneg %p32
      %p150 = pneg %p56
      %p151 = pneg %p53
      %p152 = pneg %p77
      %p153 = pneg %p74
      %p154 = pneg %p103
      %p155 = pneg %p100
      %p156 = scmp.lt.s32.totalorder %s14, 1
      %s157 = scalar_select %p156, %s14, 1
      %s158 = smul.addr %s157, 8
      %s159 = scalar_lea.vmem %s3, %s158
      %p160 = scmp.lt.s32.totalorder %s14, 1
      %s161 = scalar_select %p160, %s14, 1
      %s162 = smul.addr %s161, 8
      %s163 = smul.addr %s162, 4
      %s164 = scalar_lea.vmem %s0, %s163
      %p165 = scmp.lt.s32.totalorder %s14, 1
      %s166 = scalar_select %p165, %s14, 1
      %s167 = smul.addr %s166, 8
      %s168 = scalar_lea.vmem %s3, %s167
      %v170 = vld [vmem:[%s1] sm:$0xf]
      %v171 = vld [vmem:[%s2] sm:$0xff]
      %v172 = vlaneseq
      %v173 = vand.u32 %v172, 127
      %vm174 = vcmp.lt.s32.totalorder %v173, 49
      %v175 = vld [vmem:[%s164] sm:$0xf]
      %v176 = vld [vmem:[%s164 + $0x4] sm:$0xf]
      %v177 = vld [vmem:[%s164 + $0x8] sm:$0xf]
      %v178 = vld [vmem:[%s164 + $0xc] sm:$0xf]
      %v179 = vld [vmem:[%s164 + $0x10] sm:$0xf]
      %v180 = vld [vmem:[%s164 + $0x14] sm:$0xf]
      %v181 = vld [vmem:[%s164 + $0x18] sm:$0xf]
      %v182 = vld [vmem:[%s164 + $0x1c] sm:$0xf]
      %184 = vset.pattern.permute.xlu0 0
      %185 = vperm.xlu0 %184, %v171
      %v186 = vpop.permute.xlu0 %185
      %v196 = vunpack.c.l.b16 %v175
      %v197 = vunpack.c.l.b16 %v176
      %v198 = vunpack.c.l.b16 %v177
      %v199 = vunpack.c.l.b16 %v178
      %v200 = vunpack.c.l.b16 %v179
      %v201 = vunpack.c.l.b16 %v180
      %v202 = vunpack.c.l.b16 %v181
      %v203 = vunpack.c.l.b16 %v182
      %v204 = vpack.c.b16 %v197, %v196
      %v205 = vpack.c.b16 %v199, %v198
      %v206 = vpack.c.b16 %v201, %v200
      %v207 = vpack.c.b16 %v203, %v202
      %vm212 = vcmask 523264
      %v214 = vsel %vm212, %v170, 0
      %216 = vmatprep.subr.bf16.mxu0 0
      %217 = vmatpush1.bf16.msra.mxu0 %v204
      %218 = vmatprep.subr.bf16.mxu0 0
      %219 = vmatpush1.bf16.msra.mxu0 %v205
      %220 = vmatprep.subr.bf16.mxu0 0
      %221 = vmatpush1.bf16.msra.mxu0 %v206
      %222 = vmatprep.subr.bf16.mxu0 0
      %223 = vmatpush1.bf16.msra.mxu0 %v207
      %224 = vmatprep.subr.bf16.mxu0 0
      %225 = vmatpush1.bf16.msra.mxu0 0
      %226 = vmatprep.subr.bf16.mxu0 0
      %227 = vmatpush1.bf16.msra.mxu0 0
      %228 = vmatprep.subr.bf16.mxu0 0
      %229 = vmatpush1.bf16.msra.mxu0 0
      %230 = vmatprep.subr.bf16.mxu0 0
      %231 = vmatpush1.bf16.msra.mxu0 0
      %232 = vmatprep.subr.bf16.mxu0 0
      %233 = vmatpush1.bf16.msra.mxu0 0
      %234 = vmatprep.subr.bf16.mxu0 0
      %235 = vmatpush1.bf16.msra.mxu0 0
      %236 = vmatprep.subr.bf16.mxu0 0
      %237 = vmatpush1.bf16.msra.mxu0 0
      %238 = vmatprep.subr.bf16.mxu0 0
      %239 = vmatpush1.bf16.msra.mxu0 0
      %240 = vmatprep.subr.bf16.mxu0 0
      %241 = vmatpush1.bf16.msra.mxu0 0
      %242 = vmatprep.subr.bf16.mxu0 0
      %243 = vmatpush1.bf16.msra.mxu0 0
      %244 = vmatprep.subr.bf16.mxu0 0
      %245 = vmatpush1.bf16.msra.mxu0 0
      %246 = vmatprep.subr.bf16.mxu0 0
      %247 = vmatpush1.bf16.msra.mxu0 0
      %248 = vmatprep.mubr.bf16.mxu0 0
      %249 = vmatmul.mubr.bf16.gmra.mrb[0].mxu0 %v214
      %v250 = vpop.f32.mrb[0].mxu0
      %v251 = vadd.f32 %v186, %v250
      %v252 = vpop.f32.mrb[0].mxu0
      %v253 = vpop.f32.mrb[0].mxu0
      %v254 = vpop.f32.mrb[0].mxu0
      %255 = vdwg.mxu0
      %v256 = vmin.f32 %v251, 20.0
      %v257 = vmul.f32 %v256, 1.442695
      %v258 = vpow.pop %v257
      %v259 = vadd.f32 %v258, 2.0
      %v260 = vmul.f32 %v258, %v259
      %vm261 = vcmp.gt.f32.partialorder %v251, 20.0
      %v262 = vmul.f32 %v251, %v260
      %v263 = vadd.f32 %v260, 2.0
      %v264 = vrcp.pop %v263
      %v265 = vmul.f32 %v262, %v264
      %v266 = vsel %vm261, %v251, %v265
      %v267 = vsel %vm174, %v266, 0.0
      %268 = vadd.xlane.f32.xlu0 %v267
      %v269 = vpop.xlane.xlu0 %268
      %v270 = vmul.f32 %v269, 0.020408163
      %v271 = vsub.f32 %v266, %v270
      %v272 = vsel %vm174, %v271, 0.0
      %v273 = vmul.f32 %v272, %v272
      %274 = vadd.xlane.f32.xlu0 %v273
      %v275 = vpop.xlane.xlu0 %274
      %v276 = vmul.f32 %v275, 0.020408163
      %v277 = vadd.f32 %v276, 1e-05
      %v278 = vrsqrt.pop %v277
      %v279 = vmul.f32 %v272, %v278
      %280 = vst [vmem:[%s168] sm:$0xff] %v279
      %p281 = scmp.lt.s32.totalorder %s14, 1
      %s282 = scalar_select %p281, %s14, 1
      %s283 = smul.addr %s282, 8
      %s284 = scalar_lea.vmem %s3, %s283
      // Predicated region
      $region33: #{cnn_layer_forward.1} parent=31 // pred_check
        %p285 = pneg %p100
      $region34: #{cnn_layer_forward.1} parent=31 // pred_check_branch
        %287 = sbr.rel (%p285) target = $region36
      $region35: #{cnn_layer_forward.1} parent=31 // pred_region
        _
      $region36: #{cnn_layer_forward.1} parent=31 // pred_fallthru
        _
    $region32: #{cnn_layer_forward.1} parent=5 // pred_fallthru
      _
    %p288 = scmp.le.s32.totalorder 2, %s9
    // Predicated region
    $region37: #{cnn_layer_forward.1} parent=5 // pred_check
      %p289 = pneg %p288
    $region38: #{cnn_layer_forward.1} parent=5 // pred_check_branch
      %291 = sbr.rel (%p289) target = $region40
    $region39: #{cnn_layer_forward.1} parent=5 // pred_region
      %s292 = ssub.s32 %s9, 2
      // Predicated region
      $region41: #{cnn_layer_forward.1} parent=39 // pred_check
        %p293 = pneg %p106
      $region42: #{cnn_layer_forward.1} parent=39 // pred_check_branch
        %295 = sbr.rel (%p293) target = $region44
      $region43: #{cnn_layer_forward.1} parent=39 // pred_region
        %p296 = scmp.lt.s32.totalorder %s15, 1
        %s297 = scalar_select %p296, %s15, 1
        %s298 = smul.addr %s297, 8
        %s299 = scalar_lea.vmem %s3, %s298
      $region44: #{cnn_layer_forward.1} parent=39 // pred_fallthru
        _
    $region40: #{cnn_layer_forward.1} parent=5 // pred_fallthru
      _
  $region6: #{cnn_layer_forward.1} parent=0 // loop_footer
    %s13 = sadd.s32 1, %s9
  $region7: #{cnn_layer_forward.1} parent=0 // loop_footer_branch
    %8 = sbr.rel target = $region3
  $region8: #{cnn_layer_forward.1} parent=0 // loop_exit
    _

</llo_original>
